<compile_context>
chip_gen: v6e
topology: v6e:2x2x1
jax: 0.10.0
libtpu: 0.0.40
codegen_flags: <defaults>
</compile_context>

<pallas_src>
import jax
import jax.numpy as jnp
from jax.experimental import pallas as pl
from jax.experimental.pallas import tpu as pltpu

LANE = 128
MAX_LANE_TILE = 2048            # lanes per block (multiple of 128)
TARGET_BLOCK_BYTES = 1 << 20    # ~1 MiB per x block


def scale_kernel(x_ref, gamma_ref, beta_ref, o_ref):
    # x_ref/o_ref: (TR, TL)   gamma_ref/beta_ref: (TR, 1) float32
    x = x_ref[...].astype(jnp.float32)
    g = gamma_ref[...]               # (TR, 1) -> broadcasts over the lane axis
    b = beta_ref[...]
    o_ref[...] = (x * g + b).astype(o_ref.dtype)


def _pick_tiles(R, L, itemsize):
    """Pick (row_tile, lane_tile) honoring the (sublane, 128) alignment rule
    (full-extent blocks are exempt) and ~TARGET_BLOCK_BYTES per x block."""
    sub_align = {1: 32, 2: 16}.get(itemsize, 8)

    # Lane tile: whole axis if it already fits (full extent => exempt from the
    # 128-alignment rule), otherwise a multiple of 128 capped at MAX_LANE_TILE.
    if L <= MAX_LANE_TILE:
        tl = L
    else:
        tl = max(LANE, min(MAX_LANE_TILE, (L // LANE) * LANE))

    # Row tile: multiple of sub_align sized so one block ~= TARGET_BLOCK_BYTES.
    if R <= sub_align:
        tr = R                       # full extent => exempt
    else:
        rows = max(sub_align, TARGET_BLOCK_BYTES // max(1, tl * itemsize))
        tr = min((R // sub_align) * sub_align, (rows // sub_align) * sub_align)
        tr = max(tr, sub_align)
    return tr, tl


def scale_forward(x, gamma, beta):
    """x: (N, C, H, W); gamma, beta: (C,). Returns (N, C, H, W) in x.dtype."""
    N, C, H, W = x.shape
    R, L = N * C, H * W

    x2d = x.reshape(R, L)
    # Per-row params (row r = n*C + c -> channel c = r % C), kept in f32.
    gamma_rows = jnp.tile(gamma.astype(jnp.float32), N).reshape(R, 1)
    beta_rows = jnp.tile(beta.astype(jnp.float32), N).reshape(R, 1)

    itemsize = jnp.dtype(x.dtype).itemsize
    tr, tl = _pick_tiles(R, L, itemsize)
    grid = (pl.cdiv(R, tr), pl.cdiv(L, tl))

    out = pl.pallas_call(
        scale_kernel,
        out_shape=jax.ShapeDtypeStruct((R, L), x.dtype),
        grid_spec=pltpu.PrefetchScalarGridSpec(
            num_scalar_prefetch=0,
            grid=grid,
            in_specs=[
                pl.BlockSpec((tr, tl), lambda i, j: (i, j)),
                pl.BlockSpec((tr, 1), lambda i, j: (i, 0)),
                pl.BlockSpec((tr, 1), lambda i, j: (i, 0)),
            ],
            out_specs=pl.BlockSpec((tr, tl), lambda i, j: (i, j)),
        ),
        compiler_params=pltpu.CompilerParams(
            dimension_semantics=("parallel", "parallel"),
        ),
    )(x2d, gamma_rows, beta_rows)

    return out.reshape(N, C, H, W)


if __name__ == "__main__":
    key = jax.random.PRNGKey(0)
    N, C, H, W = 2, 4, 16, 16

    kx, kg, kb = jax.random.split(key, 3)
    x = jax.random.normal(kx, (N, C, H, W), dtype=jnp.float32)

    # Module init is gamma=ones, beta=zeros; perturb deterministically so the
    # affine transform is non-trivial.
    gamma = jnp.ones((C,), dtype=jnp.float32) + 0.1 * jax.random.normal(kg, (C,))
    beta = jnp.zeros((C,), dtype=jnp.float32) + 0.1 * jax.random.normal(kb, (C,))

    y = scale_forward(x, gamma, beta)
    y = jax.block_until_ready(y)

    # Reference (same semantics as the torch per-channel loop).
    y_ref = x * gamma[None, :, None, None] + beta[None, :, None, None]
    assert y.shape == x.shape and y.dtype == x.dtype
    assert jnp.allclose(y, y_ref, atol=1e-6, rtol=1e-6)

    print("KERNEL_OK")
</pallas_src>

<mosaic_0001>
module attributes {stable_mosaic.version = 11 : i64} {
  func.func @scale_kernel(%arg0: i32, %arg1: i32, %arg2: memref<8x256xf32, #tpu.memory_space<vmem>>, %arg3: memref<8x1xf32, #tpu.memory_space<vmem>>, %arg4: memref<8x1xf32, #tpu.memory_space<vmem>>, %arg5: memref<8x256xf32, #tpu.memory_space<vmem>>) attributes {dimension_semantics = [#tpu.dimension_semantics<parallel>, #tpu.dimension_semantics<parallel>], iteration_bounds = array<i64: 1, 1>, scalar_prefetch = 0 : i64, scratch_operands = 0 : i64, tpu.core_type = #tpu.core_type<tc>, window_params = [{transform_indices = @transform_0, window_bounds = array<i64: 8, 256>}, {transform_indices = @transform_1, window_bounds = array<i64: 8, 1>}, {transform_indices = @transform_2, window_bounds = array<i64: 8, 1>}, {transform_indices = @transform_3, window_bounds = array<i64: 8, 256>}]} {
    %c0 = arith.constant 0 : index
    %c0_0 = arith.constant 0 : index
    %0 = vector.load %arg2[%c0, %c0_0] : memref<8x256xf32, #tpu.memory_space<vmem>>, vector<8x256xf32>
    %c0_1 = arith.constant 0 : index
    %c0_2 = arith.constant 0 : index
    %1 = vector.load %arg3[%c0_1, %c0_2] : memref<8x1xf32, #tpu.memory_space<vmem>>, vector<8x1xf32>
    %c0_3 = arith.constant 0 : index
    %c0_4 = arith.constant 0 : index
    %2 = vector.load %arg4[%c0_3, %c0_4] : memref<8x1xf32, #tpu.memory_space<vmem>>, vector<8x1xf32>
    %3 = vector.broadcast %1 : vector<8x1xf32> to vector<8x256xf32>
    %4 = arith.mulf %0, %3 : vector<8x256xf32>
    %5 = vector.broadcast %2 : vector<8x1xf32> to vector<8x256xf32>
    %6 = arith.addf %4, %5 : vector<8x256xf32>
    %c0_5 = arith.constant 0 : index
    %c0_6 = arith.constant 0 : index
    %7 = vector.load %arg5[%c0_5, %c0_6] : memref<8x256xf32, #tpu.memory_space<vmem>>, vector<8x256xf32>
    tpu.vector_store %arg5[%c0_5, %c0_6], %6 {strides = array<i32>} : memref<8x256xf32, #tpu.memory_space<vmem>>, vector<8x256xf32>,
    return
  }
  func.func @transform_0(%arg0: i32, %arg1: i32) -> (i32, i32) {
    %c0_i32 = arith.constant 0 : i32
    return %arg0, %arg1 : i32, i32
  }
  func.func @transform_1(%arg0: i32, %arg1: i32) -> (i32, i32) {
    %c0_i32 = arith.constant 0 : i32
    %c0_i32_0 = arith.constant 0 : i32
    return %arg0, %c0_i32 : i32, i32
  }
  func.func @transform_2(%arg0: i32, %arg1: i32) -> (i32, i32) {
    %c0_i32 = arith.constant 0 : i32
    %c0_i32_0 = arith.constant 0 : i32
    return %arg0, %c0_i32 : i32, i32
  }
  func.func @transform_3(%arg0: i32, %arg1: i32) -> (i32, i32) {
    %c0_i32 = arith.constant 0 : i32
    return %arg0, %arg1 : i32, i32
  }
}

</mosaic_0001>

<llo_original>
// kernel: tpu_custom_call.1
$region0: #{tpu_custom_call.1}
  #allocation0 [shape = 'u32[]', space=smem, size = 0x4, offset = 0x4, fixed_abs, tag = 'smem constant byte address 0x4 - core index']
  #allocation1 [shape = 'u32[144,128]{1,0:T(1,128)}', space=vmem, size = 0x12000, scoped, tag = 'internal scratch']
  %s0 = inlined_call_operand.vmem [shape: f32[8,256], index: 0, kind: input, shape index: {}]
  %s1 = inlined_call_operand.vmem [shape: f32[8,1], index: 1, kind: input, shape index: {}]
  %s2 = inlined_call_operand.vmem [shape: f32[8,1], index: 2, kind: input, shape index: {}]
  %s3 = inlined_call_operand.hbm [shape: f32[8,256], index: 3, kind: output, shape index: {}]
  %s4 = sld [smem:[#allocation0]]
  $region22: #{tpu_custom_call.1} parent=0
    _
  %s6 = ssub.s32 1, %s4
  %s7 = scalar_select 0, %s6, %s4
  $region1: #{tpu_custom_call.1} parent=0
    #allocation2 [shape = 'u8[8192]{0}', space=vmem, size = 0x2000, scoped, tag = 'output window, operand 0, single buffered']
    #allocation3 [shape = 's32[1]{0}', space=sflag, size = 0x4, scoped, tag = 'scoped memory for tpu_custom_call.1']
    %8 = vsyncpa [#allocation3], 0
    // Predicated region
    $region2: #{tpu_custom_call.1} parent=1 // pred_check
      _
    $region3: #{tpu_custom_call.1} parent=1 // pred_check_branch
      %10 = sbr.rel (0) target = $region5
    $region4: #{tpu_custom_call.1} parent=1 // pred_region
      _
    $region5: #{tpu_custom_call.1} parent=1 // pred_fallthru
      _
    // Predicated region
    $region6: #{tpu_custom_call.1} parent=1 // pred_check
      _
    $region7: #{tpu_custom_call.1} parent=1 // pred_check_branch
      %12 = sbr.rel (0) target = $region9
    $region8: #{tpu_custom_call.1} parent=1 // pred_region
      _
    $region9: #{tpu_custom_call.1} parent=1 // pred_fallthru
      _
    // Predicated region
    $region10: #{tpu_custom_call.1} parent=1 // pred_check
      _
    $region11: #{tpu_custom_call.1} parent=1 // pred_check_branch
      %14 = sbr.rel (0) target = $region13
    $region12: #{tpu_custom_call.1} parent=1 // pred_region
      _
    $region13: #{tpu_custom_call.1} parent=1 // pred_fallthru
      _
    %v15 = vld [vmem:[%s0] sm:$0xff]
    %v16 = vld [vmem:[%s0 + $0x8] sm:$0xff]
    %v17 = vld [vmem:[%s1] sm:$0xff]
    %v18 = vld [vmem:[%s2] sm:$0xff]
    %20 = vset.pattern.permute.xlu0 0
    %21 = vperm.xlu0 %20, %v17
    %v22 = vpop.permute.xlu0 %21
    %v24 = vmul.f32 %v15, %v22
    %v25 = vmul.f32 %v16, %v22
    %27 = vset.pattern.permute.xlu0 0
    %28 = vperm.xlu0 %27, %v18
    %v29 = vpop.permute.xlu0 %28
    %v31 = vadd.f32 %v24, %v29
    %v32 = vadd.f32 %v25, %v29
    %33 = vst [vmem:[#allocation2] sm:$0xff] %v31
    %34 = vst [vmem:[#allocation2 + $0x8] sm:$0xff] %v32
    // Predicated region
    $region14: #{tpu_custom_call.1} parent=1 // pred_check
      _
    $region15: #{tpu_custom_call.1} parent=1 // pred_check_branch
      %36 = sbr.rel (0) target = $region17
    $region16: #{tpu_custom_call.1} parent=1 // pred_region
      %s38 = ssub.s32 256, 256
      %39 = vsyncadd [#allocation3], %s38
      %s41 = sshll.u32 [#allocation2], 4
      %s42 = int_to_ptr.vmem [resolvable:$true] %s41
      %44 = dma.vmem_to_hbm [thread:$0]  %s42, 256, %s3, [#allocation3]
    $region17: #{tpu_custom_call.1} parent=1 // pred_fallthru
      _
    // Predicated region
    $region18: #{tpu_custom_call.1} parent=1 // pred_check
      _
    $region19: #{tpu_custom_call.1} parent=1 // pred_check_branch
      %46 = sbr.rel (0) target = $region21
    $region20: #{tpu_custom_call.1} parent=1 // pred_region
      %47 = dma.done [#allocation3], 256
    $region21: #{tpu_custom_call.1} parent=1 // pred_fallthru
      _
    %48 = vsyncpa [#allocation3], 1

</llo_original>
